<compile_context>
chip_gen: v6e
topology: v6e:2x2x1
jax: 0.10.0
libtpu: 0.0.40
codegen_flags: <defaults>
</compile_context>

<pallas_src>
import functools

import jax
import jax.numpy as jnp
from jax import lax
from jax.experimental import pallas as pl
from jax.experimental.pallas import tpu as pltpu


def _gas_kernel(gas_ref, attr_ref, w1_ref, b1_ref, wcat_ref, bcat_ref, out_ref,
                *, gmax_pad):
    din = w1_ref.shape[0]

    # --- NonLinearHead layer 1: Linear(din -> hidden) + relu ------------------
    x = attr_ref[...]                                        # (TB, din) f32
    if din <= 16:
        # Tiny-K: a few broadcast FMAs on the VPU instead of a degenerate MXU push.
        h = x[:, 0:1] * w1_ref[0:1, :]
        for d in range(1, din):
            h = h + x[:, d:d + 1] * w1_ref[d:d + 1, :]
        h = h + b1_ref[...]
    else:
        h = jnp.dot(x, w1_ref[...], preferred_element_type=jnp.float32) + b1_ref[...]
    h = jnp.maximum(h, 0.0)                                  # (TB, hidden)

    # --- One-hot from a single lane-iota row (broadcast against the id column) --
    ids = gas_ref[...]                                       # (TB, 1) int32
    iota_row = lax.broadcasted_iota(jnp.int32, (1, gmax_pad), 1)
    onehot = (ids == iota_row).astype(jnp.float32)           # (TB, gmax_pad), exact 0/1

    # --- Single fused MXU matmul producing the concatenated output ------------
    #   [onehot | h] @ [[table_pad, 0], [0, w2]] + [0 | b2]
    #   = [ gas_embed | gas_attr_embed ]                      (TB, 2*gas_dim)
    x_cat = jnp.concatenate([onehot, h], axis=1)             # (TB, gmax_pad + hidden)
    out = jnp.dot(x_cat, wcat_ref[...],
                  preferred_element_type=jnp.float32) + bcat_ref[...]

    # Single full-width store (no masked 32-lane slice writes).
    out_ref[...] = out


def prepare_params(raw):
    """One-time host-side parameter prep.

    Pads the embedding table's row axis to a multiple of 128 and builds the fused
    block-diagonal weight / bias so the kernel needs one matmul + one store.
    """
    table = raw["gas_embed"].astype(jnp.float32)
    gmax, gas_dim = table.shape
    w1 = raw["w1"].astype(jnp.float32)                       # (din, hidden)
    b1 = raw["b1"].astype(jnp.float32).reshape(1, -1)        # (1, hidden)
    w2 = raw["w2"].astype(jnp.float32)                       # (hidden, gas_dim)
    b2 = raw["b2"].astype(jnp.float32).reshape(1, -1)        # (1, gas_dim)
    din, hid = w1.shape

    gmax_pad = ((gmax + 127) // 128) * 128                   # zero rows never selected
    w_cat = jnp.zeros((gmax_pad + hid, 2 * gas_dim), jnp.float32)
    w_cat = w_cat.at[:gmax, :gas_dim].set(table)             # top-left: embedding table
    w_cat = w_cat.at[gmax_pad:, gas_dim:].set(w2)            # bottom-right: linear2
    b_cat = jnp.concatenate([jnp.zeros((1, gas_dim), jnp.float32), b2], axis=1)

    return {"w1": w1, "b1": b1, "w_cat": w_cat, "b_cat": b_cat,
            "din": din, "hid": hid, "gas_dim": gas_dim, "gmax_pad": gmax_pad}


def gas_model_forward(gas, gas_attr, prep, *, tile_b=None):
    """gas: (B,) int ids, gas_attr: (B, din) floats. Returns (B, 2*gas_dim) f32."""
    B = gas.shape[0]
    din = gas_attr.shape[1]
    hid = prep["hid"]
    gas_dim = prep["gas_dim"]
    gmax_pad = prep["gmax_pad"]

    # Tile choice: large tiles amortize the ~0.35 us per-grid-step overhead, while
    # keeping >= 2 grid steps for B >= 16 so a v7x megacore can shard the
    # "parallel" axis across both TensorCores.
    if tile_b is None:
        if B >= 16:
            half = (B + 1) // 2
            tile_b = min(1024, ((half + 7) // 8) * 8)
        else:
            tile_b = 8
    n_tiles = pl.cdiv(B, tile_b)
    b_pad = n_tiles * tile_b

    gas_i = gas.astype(jnp.int32).reshape(B, 1)
    attr = gas_attr.astype(jnp.float32)
    if b_pad != B:
        # Pad only the ragged tail rows (id 0 / zero attrs); they are sliced off below.
        gas_i = jnp.pad(gas_i, ((0, b_pad - B), (0, 0)))
        attr = jnp.pad(attr, ((0, b_pad - B), (0, 0)))

    kernel = functools.partial(_gas_kernel, gmax_pad=gmax_pad)

    out = pl.pallas_call(
        kernel,
        out_shape=jax.ShapeDtypeStruct((b_pad, 2 * gas_dim), jnp.float32),
        grid=(n_tiles,),
        in_specs=[
            pl.BlockSpec((tile_b, 1), lambda i: (i, 0)),                   # gas ids
            pl.BlockSpec((tile_b, din), lambda i: (i, 0)),                 # gas_attr
            pl.BlockSpec((din, hid), lambda i: (0, 0)),                    # w1 (resident)
            pl.BlockSpec((1, hid), lambda i: (0, 0)),                      # b1
            pl.BlockSpec((gmax_pad + hid, 2 * gas_dim), lambda i: (0, 0)),  # fused W_cat
            pl.BlockSpec((1, 2 * gas_dim), lambda i: (0, 0)),              # fused bias
        ],
        out_specs=pl.BlockSpec((tile_b, 2 * gas_dim), lambda i: (i, 0)),
        compiler_params=pltpu.CompilerParams(
            dimension_semantics=("parallel",),
            vmem_limit_bytes=32 * 1024 * 1024,
        ),
    )(gas_i, attr, prep["w1"], prep["b1"], prep["w_cat"], prep["b_cat"])

    return out if b_pad == B else out[:B]


def make_params(key, *, din, gas_dim, gas_max_count):
    """Deterministic synthetic parameters with GasModel's shapes.

    Linear weights are stored already transposed ((in, out)) so the kernel computes
    x @ W + b, matching torch's x @ W.T + b.
    """
    k1, k2, k3, k4, k5 = jax.random.split(key, 5)
    return {
        "w1": jax.random.normal(k1, (din, din), jnp.float32) * 0.1,
        "b1": jax.random.normal(k2, (1, din), jnp.float32) * 0.1,
        "w2": jax.random.normal(k3, (din, gas_dim), jnp.float32) * 0.1,
        "b2": jax.random.normal(k4, (1, gas_dim), jnp.float32) * 0.1,
        "gas_embed": jax.random.normal(k5, (gas_max_count, gas_dim), jnp.float32),
    }


def gas_model_reference(gas, gas_attr, params):
    """Pure-JAX reference mirroring the PyTorch forward."""
    x = gas_attr.astype(jnp.float32)
    h = jnp.maximum(x @ params["w1"] + params["b1"], 0.0)
    attr_emb = h @ params["w2"] + params["b2"]
    gas_emb = params["gas_embed"][gas.astype(jnp.int32)]
    return jnp.concatenate([gas_emb, attr_emb], axis=-1)


if __name__ == "__main__":
    key = jax.random.PRNGKey(0)
    kg, ka, kw = jax.random.split(key, 3)

    B, DIN, GAS_DIM, GMAX = 8, 4, 32, 500   # small test shapes; gas_max_count=500 per spec
    gas = jax.random.randint(kg, (B,), 0, GMAX)
    gas_attr = jax.random.normal(ka, (B, DIN), jnp.float32)

    raw_params = make_params(kw, din=DIN, gas_dim=GAS_DIM, gas_max_count=GMAX)
    prep = prepare_params(raw_params)       # one-time host-side padding / fusion

    out = gas_model_forward(gas, gas_attr, prep)
    out = jax.block_until_ready(out)

    ref = gas_model_reference(gas, gas_attr, raw_params)
    assert out.shape == (B, 2 * GAS_DIM), out.shape
    assert jnp.allclose(out, ref, atol=1e-4, rtol=1e-4), "mismatch vs reference"

    print("KERNEL_OK")
</pallas_src>

<mosaic_0001>
module attributes {stable_mosaic.version = 11 : i64} {
  func.func @_gas_kernel(%arg0: i32, %arg1: memref<8x1xi32, #tpu.memory_space<vmem>>, %arg2: memref<8x4xf32, #tpu.memory_space<vmem>>, %arg3: memref<4x4xf32, #tpu.memory_space<vmem>>, %arg4: memref<1x4xf32, #tpu.memory_space<vmem>>, %arg5: memref<516x64xf32, #tpu.memory_space<vmem>>, %arg6: memref<1x64xf32, #tpu.memory_space<vmem>>, %arg7: memref<8x64xf32, #tpu.memory_space<vmem>>) attributes {dimension_semantics = [#tpu.dimension_semantics<parallel>], iteration_bounds = array<i64: 1>, scalar_prefetch = 0 : i64, scratch_operands = 0 : i64, tpu.core_type = #tpu.core_type<tc>, window_params = [{transform_indices = @transform_0, window_bounds = array<i64: 8, 1>}, {transform_indices = @transform_1, window_bounds = array<i64: 8, 4>}, {pipeline_mode = #tpu.pipeline_mode<synchronous>, transform_indices = @transform_2, window_bounds = array<i64: 4, 4>}, {pipeline_mode = #tpu.pipeline_mode<synchronous>, transform_indices = @transform_3, window_bounds = array<i64: 1, 4>}, {pipeline_mode = #tpu.pipeline_mode<synchronous>, transform_indices = @transform_4, window_bounds = array<i64: 516, 64>}, {pipeline_mode = #tpu.pipeline_mode<synchronous>, transform_indices = @transform_5, window_bounds = array<i64: 1, 64>}, {transform_indices = @transform_6, window_bounds = array<i64: 8, 64>}]} {
    %c0 = arith.constant 0 : index
    %c0_0 = arith.constant 0 : index
    %0 = vector.load %arg2[%c0, %c0_0] : memref<8x4xf32, #tpu.memory_space<vmem>>, vector<8x4xf32>
    %1 = vector.extract_strided_slice %0 {offsets = [0, 0], sizes = [8, 1], strides = [1, 1]} : vector<8x4xf32> to vector<8x1xf32>
    %c0_1 = arith.constant 0 : index
    %c0_2 = arith.constant 0 : index
    %2 = vector.load %arg3[%c0_1, %c0_2] : memref<4x4xf32, #tpu.memory_space<vmem>>, vector<1x4xf32>
    %3 = vector.broadcast %1 : vector<8x1xf32> to vector<8x4xf32>
    %4 = vector.broadcast %2 : vector<1x4xf32> to vector<8x4xf32>
    %5 = arith.mulf %3, %4 : vector<8x4xf32>
    %6 = vector.extract_strided_slice %0 {offsets = [0, 1], sizes = [8, 1], strides = [1, 1]} : vector<8x4xf32> to vector<8x1xf32>
    %c1 = arith.constant 1 : index
    %c0_3 = arith.constant 0 : index
    %7 = vector.load %arg3[%c1, %c0_3] : memref<4x4xf32, #tpu.memory_space<vmem>>, vector<1x4xf32>
    %8 = vector.broadcast %6 : vector<8x1xf32> to vector<8x4xf32>
    %9 = vector.broadcast %7 : vector<1x4xf32> to vector<8x4xf32>
    %10 = arith.mulf %8, %9 : vector<8x4xf32>
    %11 = arith.addf %5, %10 : vector<8x4xf32>
    %12 = vector.extract_strided_slice %0 {offsets = [0, 2], sizes = [8, 1], strides = [1, 1]} : vector<8x4xf32> to vector<8x1xf32>
    %c2 = arith.constant 2 : index
    %c0_4 = arith.constant 0 : index
    %13 = vector.load %arg3[%c2, %c0_4] : memref<4x4xf32, #tpu.memory_space<vmem>>, vector<1x4xf32>
    %14 = vector.broadcast %12 : vector<8x1xf32> to vector<8x4xf32>
    %15 = vector.broadcast %13 : vector<1x4xf32> to vector<8x4xf32>
    %16 = arith.mulf %14, %15 : vector<8x4xf32>
    %17 = arith.addf %11, %16 : vector<8x4xf32>
    %18 = vector.extract_strided_slice %0 {offsets = [0, 3], sizes = [8, 1], strides = [1, 1]} : vector<8x4xf32> to vector<8x1xf32>
    %c3 = arith.constant 3 : index
    %c0_5 = arith.constant 0 : index
    %19 = vector.load %arg3[%c3, %c0_5] : memref<4x4xf32, #tpu.memory_space<vmem>>, vector<1x4xf32>
    %20 = vector.broadcast %18 : vector<8x1xf32> to vector<8x4xf32>
    %21 = vector.broadcast %19 : vector<1x4xf32> to vector<8x4xf32>
    %22 = arith.mulf %20, %21 : vector<8x4xf32>
    %23 = arith.addf %17, %22 : vector<8x4xf32>
    %c0_6 = arith.constant 0 : index
    %c0_7 = arith.constant 0 : index
    %24 = vector.load %arg4[%c0_6, %c0_7] : memref<1x4xf32, #tpu.memory_space<vmem>>, vector<1x4xf32>
    %25 = vector.broadcast %24 : vector<1x4xf32> to vector<8x4xf32>
    %26 = arith.addf %23, %25 : vector<8x4xf32>
    %cst = arith.constant 0.000000e+00 : f32
    %27 = vector.broadcast %cst : f32 to vector<8x4xf32>
    %28 = arith.maximumf %26, %27 : vector<8x4xf32>
    %c0_8 = arith.constant 0 : index
    %c0_9 = arith.constant 0 : index
    %29 = vector.load %arg1[%c0_8, %c0_9] : memref<8x1xi32, #tpu.memory_space<vmem>>, vector<8x1xi32>
    %30 = tpu.iota {dimensions = array<i32: 1>} : vector<1x512xi32>
    %31 = vector.broadcast %29 : vector<8x1xi32> to vector<8x512xi32>
    %32 = vector.broadcast %30 : vector<1x512xi32> to vector<8x512xi32>
    %33 = arith.cmpi eq, %31, %32 : vector<8x512xi32>
    %34 = arith.extui %33 : vector<8x512xi1> to vector<8x512xi32>
    %35 = arith.sitofp %34 : vector<8x512xi32> to vector<8x512xf32>
    %36 = tpu.concatenate %35, %28 in 1 : vector<8x512xf32>, vector<8x4xf32> -> vector<8x516xf32>
    %c0_10 = arith.constant 0 : index
    %c0_11 = arith.constant 0 : index
    %37 = vector.load %arg5[%c0_10, %c0_11] : memref<516x64xf32, #tpu.memory_space<vmem>>, vector<516x64xf32>
    %cst_12 = arith.constant dense<0.000000e+00> : vector<8x64xf32>
    %38 = tpu.matmul %36, %37, %cst_12 {dimension_numbers = #tpu.dot_dimension_numbers<[1], [0], [0], [1], [0, 0, 1, 1], [], []>} : vector<8x516xf32>, vector<516x64xf32>, vector<8x64xf32> -> vector<8x64xf32>
    %c0_13 = arith.constant 0 : index
    %c0_14 = arith.constant 0 : index
    %39 = vector.load %arg6[%c0_13, %c0_14] : memref<1x64xf32, #tpu.memory_space<vmem>>, vector<1x64xf32>
    %40 = vector.broadcast %39 : vector<1x64xf32> to vector<8x64xf32>
    %41 = arith.addf %38, %40 : vector<8x64xf32>
    %c0_15 = arith.constant 0 : index
    %c0_16 = arith.constant 0 : index
    %42 = vector.load %arg7[%c0_15, %c0_16] : memref<8x64xf32, #tpu.memory_space<vmem>>, vector<8x64xf32>
    tpu.vector_store %arg7[%c0_15, %c0_16], %41 {strides = array<i32>} : memref<8x64xf32, #tpu.memory_space<vmem>>, vector<8x64xf32>,
    return
  }
  func.func @transform_0(%arg0: i32) -> (i32, i32) {
    %c0_i32 = arith.constant 0 : i32
    %c0_i32_0 = arith.constant 0 : i32
    return %arg0, %c0_i32 : i32, i32
  }
  func.func @transform_1(%arg0: i32) -> (i32, i32) {
    %c0_i32 = arith.constant 0 : i32
    %c0_i32_0 = arith.constant 0 : i32
    return %arg0, %c0_i32 : i32, i32
  }
  func.func @transform_2(%arg0: i32) -> (i32, i32) {
    %c0_i32 = arith.constant 0 : i32
    %c0_i32_0 = arith.constant 0 : i32
    %c0_i32_1 = arith.constant 0 : i32
    return %c0_i32, %c0_i32_0 : i32, i32
  }
  func.func @transform_3(%arg0: i32) -> (i32, i32) {
    %c0_i32 = arith.constant 0 : i32
    %c0_i32_0 = arith.constant 0 : i32
    %c0_i32_1 = arith.constant 0 : i32
    return %c0_i32, %c0_i32_0 : i32, i32
  }
  func.func @transform_4(%arg0: i32) -> (i32, i32) {
    %c0_i32 = arith.constant 0 : i32
    %c0_i32_0 = arith.constant 0 : i32
    %c0_i32_1 = arith.constant 0 : i32
    return %c0_i32, %c0_i32_0 : i32, i32
  }
  func.func @transform_5(%arg0: i32) -> (i32, i32) {
    %c0_i32 = arith.constant 0 : i32
    %c0_i32_0 = arith.constant 0 : i32
    %c0_i32_1 = arith.constant 0 : i32
    return %c0_i32, %c0_i32_0 : i32, i32
  }
  func.func @transform_6(%arg0: i32) -> (i32, i32) {
    %c0_i32 = arith.constant 0 : i32
    %c0_i32_0 = arith.constant 0 : i32
    return %arg0, %c0_i32 : i32, i32
  }
}

</mosaic_0001>

<llo_original>
// kernel: tpu_custom_call.1
$region0: #{tpu_custom_call.1}
  #allocation0 [shape = 'u32[]', space=smem, size = 0x4, offset = 0x4, fixed_abs, tag = 'smem constant byte address 0x4 - core index']
  #allocation1 [shape = 'u32[144,128]{1,0:T(1,128)}', space=vmem, size = 0x12000, scoped, tag = 'internal scratch']
  %s0 = inlined_call_operand.vmem [shape: s32[8,1], index: 0, kind: input, shape index: {}]
  %s1 = inlined_call_operand.vmem [shape: f32[8,4], index: 1, kind: input, shape index: {}]
  %s2 = inlined_call_operand.vmem [shape: f32[4,4], index: 2, kind: input, shape index: {}]
  %s3 = inlined_call_operand.vmem [shape: f32[1,4], index: 3, kind: input, shape index: {}]
  %s4 = inlined_call_operand.vmem [shape: f32[516,64], index: 4, kind: input, shape index: {}]
  %s5 = inlined_call_operand.vmem [shape: f32[1,64], index: 5, kind: input, shape index: {}]
  %s6 = inlined_call_operand.hbm [shape: f32[8,64], index: 6, kind: output, shape index: {}]
  %s7 = sld [smem:[#allocation0]]
  $region34: #{tpu_custom_call.1} parent=0
    _
  %s9 = ssub.s32 1, %s7
  %s10 = scalar_select 0, %s9, %s7
  $region1: #{tpu_custom_call.1} parent=0
    #allocation2 [shape = 'u8[4096]{0}', space=vmem, size = 0x1000, scoped, tag = 'output window, operand 0, single buffered']
    #allocation3 [shape = 's32[1]{0}', space=sflag, size = 0x4, scoped, tag = 'scoped memory for tpu_custom_call.1']
    %11 = vsyncpa [#allocation3], 0
    // Predicated region
    $region2: #{tpu_custom_call.1} parent=1 // pred_check
      _
    $region3: #{tpu_custom_call.1} parent=1 // pred_check_branch
      %13 = sbr.rel (0) target = $region5
    $region4: #{tpu_custom_call.1} parent=1 // pred_region
      _
    $region5: #{tpu_custom_call.1} parent=1 // pred_fallthru
      _
    // Predicated region
    $region6: #{tpu_custom_call.1} parent=1 // pred_check
      _
    $region7: #{tpu_custom_call.1} parent=1 // pred_check_branch
      %15 = sbr.rel (0) target = $region9
    $region8: #{tpu_custom_call.1} parent=1 // pred_region
      _
    $region9: #{tpu_custom_call.1} parent=1 // pred_fallthru
      _
    // Predicated region
    $region10: #{tpu_custom_call.1} parent=1 // pred_check
      _
    $region11: #{tpu_custom_call.1} parent=1 // pred_check_branch
      %17 = sbr.rel (0) target = $region13
    $region12: #{tpu_custom_call.1} parent=1 // pred_region
      _
    $region13: #{tpu_custom_call.1} parent=1 // pred_fallthru
      _
    // Predicated region
    $region14: #{tpu_custom_call.1} parent=1 // pred_check
      _
    $region15: #{tpu_custom_call.1} parent=1 // pred_check_branch
      %19 = sbr.rel (0) target = $region17
    $region16: #{tpu_custom_call.1} parent=1 // pred_region
      _
    $region17: #{tpu_custom_call.1} parent=1 // pred_fallthru
      _
    // Predicated region
    $region18: #{tpu_custom_call.1} parent=1 // pred_check
      _
    $region19: #{tpu_custom_call.1} parent=1 // pred_check_branch
      %21 = sbr.rel (0) target = $region21
    $region20: #{tpu_custom_call.1} parent=1 // pred_region
      _
    $region21: #{tpu_custom_call.1} parent=1 // pred_fallthru
      _
    // Predicated region
    $region22: #{tpu_custom_call.1} parent=1 // pred_check
      _
    $region23: #{tpu_custom_call.1} parent=1 // pred_check_branch
      %23 = sbr.rel (0) target = $region25
    $region24: #{tpu_custom_call.1} parent=1 // pred_region
      _
    $region25: #{tpu_custom_call.1} parent=1 // pred_fallthru
      _
    %v24 = vld [vmem:[%s1] sm:$0xff]
    %v25 = vld [vmem:[%s2] sm:$0x1]
    %27 = vset.pattern.permute.xlu0 0
    %28 = vperm.xlu0 %27, %v24
    %v29 = vpop.permute.xlu0 %28
    %v31 = vlaneseq
    %v32 = vshrl.u32 %v31, 7
    %v33 = vsub.s32 0, %v32
    %v34 = vrot.slane %v25, %v33
    %v35 = vmul.f32 %v29, %v34
    %v36 = vld [vmem:[%s2 + $0x1] sm:$0x1]
    %37 = vset.pattern.permute.xlu0 1
    %38 = vperm.xlu0 %37, %v24
    %v39 = vpop.permute.xlu0 %38
    %v41 = vlaneseq
    %v42 = vshrl.u32 %v41, 7
    %v43 = vsub.s32 0, %v42
    %v44 = vrot.slane %v36, %v43
    %v45 = vmul.f32 %v39, %v44
    %v46 = vadd.f32 %v35, %v45
    %v47 = vld [vmem:[%s2 + $0x2] sm:$0x1]
    %48 = vset.pattern.permute.xlu0 2
    %49 = vperm.xlu0 %48, %v24
    %v50 = vpop.permute.xlu0 %49
    %v52 = vlaneseq
    %v53 = vshrl.u32 %v52, 7
    %v54 = vsub.s32 0, %v53
    %v55 = vrot.slane %v47, %v54
    %v56 = vmul.f32 %v50, %v55
    %v57 = vadd.f32 %v46, %v56
    %v58 = vld [vmem:[%s2 + $0x3] sm:$0x1]
    %59 = vset.pattern.permute.xlu0 3
    %60 = vperm.xlu0 %59, %v24
    %v61 = vpop.permute.xlu0 %60
    %v63 = vlaneseq
    %v64 = vshrl.u32 %v63, 7
    %v65 = vsub.s32 0, %v64
    %v66 = vrot.slane %v58, %v65
    %v67 = vmul.f32 %v61, %v66
    %v68 = vadd.f32 %v57, %v67
    %v69 = vld [vmem:[%s3] sm:$0x1]
    %v71 = vlaneseq
    %v72 = vshrl.u32 %v71, 7
    %v73 = vsub.s32 0, %v72
    %v74 = vrot.slane %v69, %v73
    %v76 = vadd.f32 %v68, %v74
    %v77 = vmax.f32 %v76, 0.0
    %v78 = vld [vmem:[%s0] sm:$0xff]
    %v79 = vlaneseq
    %v80 = vand.u32 %v79, 127
    %v81 = vadd.s32 %v80, 128
    %v82 = vadd.s32 %v80, 256
    %v83 = vadd.s32 %v80, 384
    %84 = vset.pattern.permute.xlu0 0
    %85 = vperm.xlu0 %84, %v78
    %v86 = vpop.permute.xlu0 %85
    %vm87 = vcmp.eq.s32.totalorder %v86, %v80
    %vm88 = vcmp.eq.s32.totalorder %v86, %v81
    %vm89 = vcmp.eq.s32.totalorder %v86, %v82
    %vm90 = vcmp.eq.s32.totalorder %v86, %v83
    %v91 = vsel %vm87, 1, 0
    %v92 = vsel %vm88, 1, 0
    %v93 = vsel %vm89, 1, 0
    %v94 = vsel %vm90, 1, 0
    %v95 = vcvt.s32.f32 %v91
    %v96 = vcvt.s32.f32 %v92
    %v97 = vcvt.s32.f32 %v93
    %v98 = vcvt.s32.f32 %v94
    %v99 = vld [vmem:[%s4] sm:$0xff]
    %v100 = vld [vmem:[%s4 + $0x8] sm:$0xff]
    %v101 = vld [vmem:[%s4 + $0x10] sm:$0xff]
    %v102 = vld [vmem:[%s4 + $0x18] sm:$0xff]
    %v103 = vld [vmem:[%s4 + $0x20] sm:$0xff]
    %v104 = vld [vmem:[%s4 + $0x28] sm:$0xff]
    %v105 = vld [vmem:[%s4 + $0x30] sm:$0xff]
    %v106 = vld [vmem:[%s4 + $0x38] sm:$0xff]
    %v107 = vld [vmem:[%s4 + $0x40] sm:$0xff]
    %v108 = vld [vmem:[%s4 + $0x48] sm:$0xff]
    %v109 = vld [vmem:[%s4 + $0x50] sm:$0xff]
    %v110 = vld [vmem:[%s4 + $0x58] sm:$0xff]
    %v111 = vld [vmem:[%s4 + $0x60] sm:$0xff]
    %v112 = vld [vmem:[%s4 + $0x68] sm:$0xff]
    %v113 = vld [vmem:[%s4 + $0x70] sm:$0xff]
    %v114 = vld [vmem:[%s4 + $0x78] sm:$0xff]
    %v115 = vld [vmem:[%s4 + $0x80] sm:$0xff]
    %v116 = vld [vmem:[%s4 + $0x88] sm:$0xff]
    %v117 = vld [vmem:[%s4 + $0x90] sm:$0xff]
    %v118 = vld [vmem:[%s4 + $0x98] sm:$0xff]
    %v119 = vld [vmem:[%s4 + $0xa0] sm:$0xff]
    %v120 = vld [vmem:[%s4 + $0xa8] sm:$0xff]
    %v121 = vld [vmem:[%s4 + $0xb0] sm:$0xff]
    %v122 = vld [vmem:[%s4 + $0xb8] sm:$0xff]
    %v123 = vld [vmem:[%s4 + $0xc0] sm:$0xff]
    %v124 = vld [vmem:[%s4 + $0xc8] sm:$0xff]
    %v125 = vld [vmem:[%s4 + $0xd0] sm:$0xff]
    %v126 = vld [vmem:[%s4 + $0xd8] sm:$0xff]
    %v127 = vld [vmem:[%s4 + $0xe0] sm:$0xff]
    %v128 = vld [vmem:[%s4 + $0xe8] sm:$0xff]
    %v129 = vld [vmem:[%s4 + $0xf0] sm:$0xff]
    %v130 = vld [vmem:[%s4 + $0xf8] sm:$0xff]
    %v131 = vld [vmem:[%s4 + $0x100] sm:$0xff]
    %v132 = vld [vmem:[%s4 + $0x108] sm:$0xff]
    %v133 = vld [vmem:[%s4 + $0x110] sm:$0xff]
    %v134 = vld [vmem:[%s4 + $0x118] sm:$0xff]
    %v135 = vld [vmem:[%s4 + $0x120] sm:$0xff]
    %v136 = vld [vmem:[%s4 + $0x128] sm:$0xff]
    %v137 = vld [vmem:[%s4 + $0x130] sm:$0xff]
    %v138 = vld [vmem:[%s4 + $0x138] sm:$0xff]
    %v139 = vld [vmem:[%s4 + $0x140] sm:$0xff]
    %v140 = vld [vmem:[%s4 + $0x148] sm:$0xff]
    %v141 = vld [vmem:[%s4 + $0x150] sm:$0xff]
    %v142 = vld [vmem:[%s4 + $0x158] sm:$0xff]
    %v143 = vld [vmem:[%s4 + $0x160] sm:$0xff]
    %v144 = vld [vmem:[%s4 + $0x168] sm:$0xff]
    %v145 = vld [vmem:[%s4 + $0x170] sm:$0xff]
    %v146 = vld [vmem:[%s4 + $0x178] sm:$0xff]
    %v147 = vld [vmem:[%s4 + $0x180] sm:$0xff]
    %v148 = vld [vmem:[%s4 + $0x188] sm:$0xff]
    %v149 = vld [vmem:[%s4 + $0x190] sm:$0xff]
    %v150 = vld [vmem:[%s4 + $0x198] sm:$0xff]
    %v151 = vld [vmem:[%s4 + $0x1a0] sm:$0xff]
    %v152 = vld [vmem:[%s4 + $0x1a8] sm:$0xff]
    %v153 = vld [vmem:[%s4 + $0x1b0] sm:$0xff]
    %v154 = vld [vmem:[%s4 + $0x1b8] sm:$0xff]
    %v155 = vld [vmem:[%s4 + $0x1c0] sm:$0xff]
    %v156 = vld [vmem:[%s4 + $0x1c8] sm:$0xff]
    %v157 = vld [vmem:[%s4 + $0x1d0] sm:$0xff]
    %v158 = vld [vmem:[%s4 + $0x1d8] sm:$0xff]
    %v159 = vld [vmem:[%s4 + $0x1e0] sm:$0xff]
    %v160 = vld [vmem:[%s4 + $0x1e8] sm:$0xff]
    %v161 = vld [vmem:[%s4 + $0x1f0] sm:$0xff]
    %v162 = vld [vmem:[%s4 + $0x1f8] sm:$0xff]
    %v163 = vld [vmem:[%s4 + $0x200] sm:$0xf]
    %v164 = vld [vmem:[%s5] sm:$0x1]
    %v166 = vlaneseq
    %v167 = vshrl.u32 %v166, 7
    %v168 = vsub.s32 0, %v167
    %v169 = vrot.slane %v164, %v168
    %vm171 = vcmask 31744
    %v173 = vsel %vm171, %v77, 0
    %vm175 = vcmask 1043456
    %v177 = vsel %vm175, %v163, 0
    %179 = vmatprep.subr.mxu0 0.0
    %180 = vmatpush1.msra.mxu0 %v114
    %181 = vmatprep.subr.mxu0 0.0
    %182 = vmatpush1.msra.mxu0 %v113
    %183 = vmatprep.subr.mxu0 0.0
    %184 = vmatpush1.msra.mxu0 %v112
    %185 = vmatprep.subr.mxu0 0.0
    %186 = vmatpush1.msra.mxu0 %v111
    %187 = vmatprep.subr.mxu0 0.0
    %188 = vmatpush1.msra.mxu0 %v110
    %189 = vmatprep.subr.mxu0 0.0
    %190 = vmatpush1.msra.mxu0 %v109
    %191 = vmatprep.subr.mxu0 0.0
    %192 = vmatpush1.msra.mxu0 %v108
    %193 = vmatprep.subr.mxu0 0.0
    %194 = vmatpush1.msra.mxu0 %v107
    %195 = vmatprep.subr.mxu0 0.0
    %196 = vmatpush1.msra.mxu0 %v106
    %197 = vmatprep.subr.mxu0 0.0
    %198 = vmatpush1.msra.mxu0 %v105
    %199 = vmatprep.subr.mxu0 0.0
    %200 = vmatpush1.msra.mxu0 %v104
    %201 = vmatprep.subr.mxu0 0.0
    %202 = vmatpush1.msra.mxu0 %v103
    %203 = vmatprep.subr.mxu0 0.0
    %204 = vmatpush1.msra.mxu0 %v102
    %205 = vmatprep.subr.mxu0 0.0
    %206 = vmatpush1.msra.mxu0 %v101
    %207 = vmatprep.subr.mxu0 0.0
    %208 = vmatpush1.msra.mxu0 %v100
    %209 = vmatprep.subr.mxu0 0.0
    %210 = vmatpush1.msra.mxu0 %v99
    %211 = vmatprep.subr.mxu0 0.0
    %212 = vmatpush2.msra.mxu0 %v130
    %213 = vmatprep.subr.mxu0 0.0
    %214 = vmatpush2.msra.mxu0 %v129
    %215 = vmatprep.subr.mxu0 0.0
    %216 = vmatpush2.msra.mxu0 %v128
    %217 = vmatprep.subr.mxu0 0.0
    %218 = vmatpush2.msra.mxu0 %v127
    %219 = vmatprep.subr.mxu0 0.0
    %220 = vmatpush2.msra.mxu0 %v126
    %221 = vmatprep.subr.mxu0 0.0
    %222 = vmatpush2.msra.mxu0 %v125
    %223 = vmatprep.subr.mxu0 0.0
    %224 = vmatpush2.msra.mxu0 %v124
    %225 = vmatprep.subr.mxu0 0.0
    %226 = vmatpush2.msra.mxu0 %v123
    %227 = vmatprep.subr.mxu0 0.0
    %228 = vmatpush2.msra.mxu0 %v122
    %229 = vmatprep.subr.mxu0 0.0
    %230 = vmatpush2.msra.mxu0 %v121
    %231 = vmatprep.subr.mxu0 0.0
    %232 = vmatpush2.msra.mxu0 %v120
    %233 = vmatprep.subr.mxu0 0.0
    %234 = vmatpush2.msra.mxu0 %v119
    %235 = vmatprep.subr.mxu0 0.0
    %236 = vmatpush2.msra.mxu0 %v118
    %237 = vmatprep.subr.mxu0 0.0
    %238 = vmatpush2.msra.mxu0 %v117
    %239 = vmatprep.subr.mxu0 0.0
    %240 = vmatpush2.msra.mxu0 %v116
    %241 = vmatprep.subr.mxu0 0.0
    %242 = vmatpush2.msra.mxu0 %v115
    %243 = vmatprep.mubr.f32.mxu0 %v96
    %244 = vmatmul.mubr.f32.gmra.mxu0 %v95
    %v245 = vpop.f32.mrf.mxu0
    %v246 = vadd.f32 %v169, %v245
    %v247 = vpop.f32.mrf.mxu0
    %248 = vdwg.mxu0
    %249 = vmatprep.subr.mxu0 0.0
    %250 = vmatpush1.msra.mxu0 %v146
    %251 = vmatprep.subr.mxu0 0.0
    %252 = vmatpush1.msra.mxu0 %v145
    %253 = vmatprep.subr.mxu0 0.0
    %254 = vmatpush1.msra.mxu0 %v144
    %255 = vmatprep.subr.mxu0 0.0
    %256 = vmatpush1.msra.mxu0 %v143
    %257 = vmatprep.subr.mxu0 0.0
    %258 = vmatpush1.msra.mxu0 %v142
    %259 = vmatprep.subr.mxu0 0.0
    %260 = vmatpush1.msra.mxu0 %v141
    %261 = vmatprep.subr.mxu0 0.0
    %262 = vmatpush1.msra.mxu0 %v140
    %263 = vmatprep.subr.mxu0 0.0
    %264 = vmatpush1.msra.mxu0 %v139
    %265 = vmatprep.subr.mxu0 0.0
    %266 = vmatpush1.msra.mxu0 %v138
    %267 = vmatprep.subr.mxu0 0.0
    %268 = vmatpush1.msra.mxu0 %v137
    %269 = vmatprep.subr.mxu0 0.0
    %270 = vmatpush1.msra.mxu0 %v136
    %271 = vmatprep.subr.mxu0 0.0
    %272 = vmatpush1.msra.mxu0 %v135
    %273 = vmatprep.subr.mxu0 0.0
    %274 = vmatpush1.msra.mxu0 %v134
    %275 = vmatprep.subr.mxu0 0.0
    %276 = vmatpush1.msra.mxu0 %v133
    %277 = vmatprep.subr.mxu0 0.0
    %278 = vmatpush1.msra.mxu0 %v132
    %279 = vmatprep.subr.mxu0 0.0
    %280 = vmatpush1.msra.mxu0 %v131
    %281 = vmatprep.subr.mxu0 0.0
    %282 = vmatpush2.msra.mxu0 %v162
    %283 = vmatprep.subr.mxu0 0.0
    %284 = vmatpush2.msra.mxu0 %v161
    %285 = vmatprep.subr.mxu0 0.0
    %286 = vmatpush2.msra.mxu0 %v160
    %287 = vmatprep.subr.mxu0 0.0
    %288 = vmatpush2.msra.mxu0 %v159
    %289 = vmatprep.subr.mxu0 0.0
    %290 = vmatpush2.msra.mxu0 %v158
    %291 = vmatprep.subr.mxu0 0.0
    %292 = vmatpush2.msra.mxu0 %v157
    %293 = vmatprep.subr.mxu0 0.0
    %294 = vmatpush2.msra.mxu0 %v156
    %295 = vmatprep.subr.mxu0 0.0
    %296 = vmatpush2.msra.mxu0 %v155
    %297 = vmatprep.subr.mxu0 0.0
    %298 = vmatpush2.msra.mxu0 %v154
    %299 = vmatprep.subr.mxu0 0.0
    %300 = vmatpush2.msra.mxu0 %v153
    %301 = vmatprep.subr.mxu0 0.0
    %302 = vmatpush2.msra.mxu0 %v152
    %303 = vmatprep.subr.mxu0 0.0
    %304 = vmatpush2.msra.mxu0 %v151
    %305 = vmatprep.subr.mxu0 0.0
    %306 = vmatpush2.msra.mxu0 %v150
    %307 = vmatprep.subr.mxu0 0.0
    %308 = vmatpush2.msra.mxu0 %v149
    %309 = vmatprep.subr.mxu0 0.0
    %310 = vmatpush2.msra.mxu0 %v148
    %311 = vmatprep.subr.mxu0 0.0
    %312 = vmatpush2.msra.mxu0 %v147
    %313 = vmatprep.mubr.f32.mxu0 %v98
    %314 = vmatmul.mubr.f32.gmra.mxu0 %v97
    %v315 = vpop.f32.mrf.mxu0
    %v316 = vadd.f32 %v246, %v315
    %v317 = vpop.f32.mrf.mxu0
    %318 = vdwg.mxu0
    %319 = vmatprep.subr.mxu0 0.0
    %320 = vmatpush1.msra.mxu0 0.0
    %321 = vmatprep.subr.mxu0 0.0
    %322 = vmatpush1.msra.mxu0 0.0
    %323 = vmatprep.subr.mxu0 0.0
    %324 = vmatpush1.msra.mxu0 0.0
    %325 = vmatprep.subr.mxu0 0.0
    %326 = vmatpush1.msra.mxu0 0.0
    %327 = vmatprep.subr.mxu0 0.0
    %328 = vmatpush1.msra.mxu0 0.0
    %329 = vmatprep.subr.mxu0 0.0
    %330 = vmatpush1.msra.mxu0 0.0
    %331 = vmatprep.subr.mxu0 0.0
    %332 = vmatpush1.msra.mxu0 0.0
    %333 = vmatprep.subr.mxu0 0.0
    %334 = vmatpush1.msra.mxu0 0.0
    %335 = vmatprep.subr.mxu0 0.0
    %336 = vmatpush1.msra.mxu0 0.0
    %337 = vmatprep.subr.mxu0 0.0
    %338 = vmatpush1.msra.mxu0 0.0
    %339 = vmatprep.subr.mxu0 0.0
    %340 = vmatpush1.msra.mxu0 0.0
    %341 = vmatprep.subr.mxu0 0.0
    %342 = vmatpush1.msra.mxu0 0.0
    %343 = vmatprep.subr.mxu0 0.0
    %344 = vmatpush1.msra.mxu0 0.0
    %345 = vmatprep.subr.mxu0 0.0
    %346 = vmatpush1.msra.mxu0 0.0
    %347 = vmatprep.subr.mxu0 0.0
    %348 = vmatpush1.msra.mxu0 0.0
    %349 = vmatprep.subr.mxu0 0.0
    %350 = vmatpush1.msra.mxu0 %v177
    %351 = vmatprep.subr.mxu0 0.0
    %352 = vmatpush2.msra.mxu0 0.0
    %353 = vmatprep.subr.mxu0 0.0
    %354 = vmatpush2.msra.mxu0 0.0
    %355 = vmatprep.subr.mxu0 0.0
    %356 = vmatpush2.msra.mxu0 0.0
    %357 = vmatprep.subr.mxu0 0.0
    %358 = vmatpush2.msra.mxu0 0.0
    %359 = vmatprep.subr.mxu0 0.0
    %360 = vmatpush2.msra.mxu0 0.0
    %361 = vmatprep.subr.mxu0 0.0
    %362 = vmatpush2.msra.mxu0 0.0
    %363 = vmatprep.subr.mxu0 0.0
    %364 = vmatpush2.msra.mxu0 0.0
    %365 = vmatprep.subr.mxu0 0.0
    %366 = vmatpush2.msra.mxu0 0.0
    %367 = vmatprep.subr.mxu0 0.0
    %368 = vmatpush2.msra.mxu0 0.0
    %369 = vmatprep.subr.mxu0 0.0
    %370 = vmatpush2.msra.mxu0 0.0
    %371 = vmatprep.subr.mxu0 0.0
    %372 = vmatpush2.msra.mxu0 0.0
    %373 = vmatprep.subr.mxu0 0.0
    %374 = vmatpush2.msra.mxu0 0.0
    %375 = vmatprep.subr.mxu0 0.0
    %376 = vmatpush2.msra.mxu0 0.0
    %377 = vmatprep.subr.mxu0 0.0
    %378 = vmatpush2.msra.mxu0 0.0
    %379 = vmatprep.subr.mxu0 0.0
    %380 = vmatpush2.msra.mxu0 0.0
    %381 = vmatprep.subr.mxu0 0.0
    %382 = vmatpush2.msra.mxu0 0.0
    %383 = vmatprep.mubr.f32.mxu0 0.0
    %384 = vmatmul.mubr.f32.gmra.mxu0 %v173
    %v385 = vpop.f32.mrf.mxu0
    %v386 = vadd.f32 %v316, %v385
    %v387 = vpop.f32.mrf.mxu0
    %388 = vdwg.mxu0
    %vm389 = vcmask 523264
    %390 = vst.msk [vmem:[#allocation2] sm:$0xff] %vm389, %v386
    // Predicated region
    $region26: #{tpu_custom_call.1} parent=1 // pred_check
      _
    $region27: #{tpu_custom_call.1} parent=1 // pred_check_branch
      %392 = sbr.rel (0) target = $region29
    $region28: #{tpu_custom_call.1} parent=1 // pred_region
      %s394 = ssub.s32 128, 128
      %395 = vsyncadd [#allocation3], %s394
      %s397 = sshll.u32 [#allocation2], 4
      %s398 = int_to_ptr.vmem [resolvable:$true] %s397
      %400 = dma.vmem_to_hbm [thread:$0]  %s398, 128, %s6, [#allocation3]
    $region29: #{tpu_custom_call.1} parent=1 // pred_fallthru
      _
    // Predicated region
    $region30: #{tpu_custom_call.1} parent=1 // pred_check
      _
    $region31: #{tpu_custom_call.1} parent=1 // pred_check_branch
      %402 = sbr.rel (0) target = $region33
    $region32: #{tpu_custom_call.1} parent=1 // pred_region
      %403 = dma.done [#allocation3], 128
    $region33: #{tpu_custom_call.1} parent=1 // pred_fallthru
      _
    %404 = vsyncpa [#allocation3], 1

</llo_original>
